<compile_context>
chip_gen: v7x
topology: tpu7x:2x2x1
jax: 0.10.0
libtpu: 0.0.40
codegen_flags: <defaults>
</compile_context>

<pallas_src>
import functools

import jax
import jax.numpy as jnp
from jax.experimental import pallas as pl
from jax.experimental.pallas import tpu as pltpu


def _round_up(x: int, m: int) -> int:
    return ((x + m - 1) // m) * m


def _binary_linear_kernel(x_ref, w_ref, b_ref, o_ref, acc_ref):
    """One (tm, tn) output tile of  y = x @ binary_sign(W) + b.

    Grid: (i over M tiles, j over N tiles, k over K tiles); k is a reduction.
    """
    k = pl.program_id(2)

    @pl.when(k == 0)
    def _():
        acc_ref[...] = jnp.zeros_like(acc_ref)

    # Binarize the weight tile in-kernel: torch sign() with sign(0) := +1
    #   ==>  w >= 0 -> +1 else -1.   (VPU cmp+select, hidden under MXU work.)
    w_bin = jnp.where(w_ref[...] >= 0.0, 1.0, -1.0).astype(x_ref.dtype)
    acc_ref[...] += jnp.dot(x_ref[...], w_bin,
                            preferred_element_type=jnp.float32)

    @pl.when(k == pl.num_programs(2) - 1)
    def _():
        # Bias add once per output tile (broadcast over tm rows), then store
        # a lane-dense (tm, 128k) tile.
        o_ref[...] = (acc_ref[...] + b_ref[...]).astype(o_ref.dtype)


def _binary_linear_padded(x, wt, b2, *, tm, tn, tk):
    """pallas_call on already-padded operands.

    x:  (M, K) f32   (M % tm == 0, K % tk == 0)
    wt: (K, N) f32   weight already transposed to (in, out), N % tn == 0
    b2: (1, N) f32
    """
    M, K = x.shape
    N = wt.shape[1]
    grid = (M // tm, N // tn, K // tk)
    return pl.pallas_call(
        _binary_linear_kernel,
        out_shape=jax.ShapeDtypeStruct((M, N), jnp.float32),
        grid_spec=pltpu.PrefetchScalarGridSpec(
            num_scalar_prefetch=0,
            grid=grid,
            in_specs=[
                pl.BlockSpec((tm, tk), lambda i, j, k: (i, k)),
                pl.BlockSpec((tk, tn), lambda i, j, k: (k, j)),
                pl.BlockSpec((1, tn), lambda i, j, k: (0, j)),
            ],
            out_specs=pl.BlockSpec((tm, tn), lambda i, j, k: (i, j)),
            scratch_shapes=[pltpu.VMEM((tm, tn), jnp.float32)],
        ),
        compiler_params=pltpu.CompilerParams(
            dimension_semantics=("parallel", "parallel", "arbitrary")),
    )(x, wt, b2)


@jax.jit
def binary_linear(x, weight, bias):
    """JAX/Pallas forward of BinaryLinear.

    x:      (B, in_features)            f32
    weight: (out_features, in_features) f32 (PyTorch layout)
    bias:   (out_features,)             f32
    returns (B, out_features)           f32
    """
    B, Din = x.shape
    Dout = weight.shape[0]

    # Tile sizes: lane-dense (multiple of 128 on the last dim, 8 on the
    # second-to-last), capped so a v7x-sized VMEM budget is never an issue.
    tn = 128
    tm = min(_round_up(B, 8), 128)
    tk = min(_round_up(Din, 128), 512)

    M = _round_up(B, tm)
    K = _round_up(Din, tk)
    N = _round_up(Dout, tn)

    # Zero-pad to tile multiples (layout plumbing outside the kernel).
    xp = jnp.zeros((M, K), jnp.float32).at[:B, :Din].set(x.astype(jnp.float32))
    wp = jnp.zeros((K, N), jnp.float32).at[:Din, :Dout].set(
        weight.T.astype(jnp.float32))
    bp = jnp.zeros((1, N), jnp.float32).at[0, :Dout].set(
        bias.astype(jnp.float32))

    out = _binary_linear_padded(xp, wp, bp, tm=tm, tn=tn, tk=tk)
    return out[:B, :Dout]


class BinaryLinearPallas:
    """Forward-only port of the PyTorch BinaryLinear module."""

    def __init__(self, in_features, out_features, bias=True, key=None):
        if key is None:
            key = jax.random.PRNGKey(0)
        self.in_features = in_features
        self.out_features = out_features
        # torch.randn(out, in) * 0.1
        self.weight = jax.random.normal(
            key, (out_features, in_features), jnp.float32) * 0.1
        self.bias = (jnp.zeros((out_features,), jnp.float32)
                     if bias else jnp.zeros((out_features,), jnp.float32))
        # TODO(synk): the BinarySign straight-through-estimator backward
        # (grad masked where |x| > 0.8) is training-only and not part of the
        # forward pass implemented here.

    def __call__(self, x):
        return binary_linear(x, self.weight, self.bias)


def _reference_forward(x, weight, bias):
    """Plain-JAX reference mirroring the PyTorch forward."""
    w_bin = jnp.where(weight >= 0.0, 1.0, -1.0)  # sign with sign(0) := +1
    return x @ w_bin.T + bias


if __name__ == "__main__":
    batch = 8
    in_features = 32
    out_features = 16

    key = jax.random.PRNGKey(0)
    kx, kw = jax.random.split(key)
    x = jax.random.normal(kx, (batch, in_features), jnp.float32)

    layer = BinaryLinearPallas(in_features, out_features, bias=True, key=kw)

    out = layer(x)
    out = jax.block_until_ready(out)

    ref = _reference_forward(x, layer.weight, layer.bias)
    assert out.shape == (batch, out_features), out.shape
    assert jnp.allclose(out, ref, atol=1e-5, rtol=1e-5), "mismatch vs reference"

    print("KERNEL_OK")
</pallas_src>

<mosaic_0001>
module attributes {stable_mosaic.version = 11 : i64} {
  func.func @_binary_linear_kernel(%arg0: i32, %arg1: i32, %arg2: i32, %arg3: memref<8x128xf32, #tpu.memory_space<vmem>>, %arg4: memref<128x128xf32, #tpu.memory_space<vmem>>, %arg5: memref<1x128xf32, #tpu.memory_space<vmem>>, %arg6: memref<8x128xf32, #tpu.memory_space<vmem>>, %arg7: memref<8x128xf32, #tpu.memory_space<vmem>>) attributes {dimension_semantics = [#tpu.dimension_semantics<parallel>, #tpu.dimension_semantics<parallel>, #tpu.dimension_semantics<arbitrary>], iteration_bounds = array<i64: 1, 1, 1>, scalar_prefetch = 0 : i64, scratch_operands = 1 : i64, tpu.core_type = #tpu.core_type<tc>, window_params = [{transform_indices = @transform_0, window_bounds = array<i64: 8, 128>}, {transform_indices = @transform_1, window_bounds = array<i64: 128, 128>}, {transform_indices = @transform_2, window_bounds = array<i64: 1, 128>}, {transform_indices = @transform_3, window_bounds = array<i64: 8, 128>}]} {
    %c0_i32 = arith.constant 0 : i32
    %0 = arith.cmpi eq, %arg2, %c0_i32 : i32
    %1 = arith.extui %0 : i1 to i32
    %c0_i32_0 = arith.constant 0 : i32
    %2 = arith.cmpi ne, %1, %c0_i32_0 : i32
    scf.if %2 {
      %cst_13 = arith.constant 0.000000e+00 : f32
      %17 = vector.broadcast %cst_13 : f32 to vector<8x128xf32>
      %c0_14 = arith.constant 0 : index
      %c0_15 = arith.constant 0 : index
      %18 = vector.load %arg7[%c0_14, %c0_15] : memref<8x128xf32, #tpu.memory_space<vmem>>, vector<8x128xf32>
      tpu.vector_store %arg7[%c0_14, %c0_15], %17 {strides = array<i32>} : memref<8x128xf32, #tpu.memory_space<vmem>>, vector<8x128xf32>,
    } else {
    }
    %c0 = arith.constant 0 : index
    %c0_1 = arith.constant 0 : index
    %3 = vector.load %arg4[%c0, %c0_1] : memref<128x128xf32, #tpu.memory_space<vmem>>, vector<128x128xf32>
    %cst = arith.constant 0.000000e+00 : f32
    %4 = vector.broadcast %cst : f32 to vector<128x128xf32>
    %5 = arith.cmpf oge, %3, %4 : vector<128x128xf32>
    %cst_2 = arith.constant 1.000000e+00 : f32
    %cst_3 = arith.constant -1.000000e+00 : f32
    %6 = vector.broadcast %cst_2 : f32 to vector<128x128xf32>
    %7 = vector.broadcast %cst_3 : f32 to vector<128x128xf32>
    %8 = arith.select %5, %6, %7 : vector<128x128xi1>, vector<128x128xf32>
    %c0_4 = arith.constant 0 : index
    %c0_5 = arith.constant 0 : index
    %9 = vector.load %arg7[%c0_4, %c0_5] : memref<8x128xf32, #tpu.memory_space<vmem>>, vector<8x128xf32>
    %c0_6 = arith.constant 0 : index
    %c0_7 = arith.constant 0 : index
    %10 = vector.load %arg3[%c0_6, %c0_7] : memref<8x128xf32, #tpu.memory_space<vmem>>, vector<8x128xf32>
    %cst_8 = arith.constant dense<0.000000e+00> : vector<8x128xf32>
    %11 = tpu.matmul %10, %8, %cst_8 {dimension_numbers = #tpu.dot_dimension_numbers<[1], [0], [0], [1], [0, 0, 1, 1], [], []>} : vector<8x128xf32>, vector<128x128xf32>, vector<8x128xf32> -> vector<8x128xf32>
    %12 = arith.addf %9, %11 : vector<8x128xf32>
    %c0_9 = arith.constant 0 : index
    %c0_10 = arith.constant 0 : index
    %13 = vector.load %arg7[%c0_9, %c0_10] : memref<8x128xf32, #tpu.memory_space<vmem>>, vector<8x128xf32>
    tpu.vector_store %arg7[%c0_9, %c0_10], %12 {strides = array<i32>} : memref<8x128xf32, #tpu.memory_space<vmem>>, vector<8x128xf32>,
    %c0_i32_11 = arith.constant 0 : i32
    %14 = arith.cmpi eq, %arg2, %c0_i32_11 : i32
    %15 = arith.extui %14 : i1 to i32
    %c0_i32_12 = arith.constant 0 : i32
    %16 = arith.cmpi ne, %15, %c0_i32_12 : i32
    scf.if %16 {
      %c0_13 = arith.constant 0 : index
      %c0_14 = arith.constant 0 : index
      %17 = vector.load %arg7[%c0_13, %c0_14] : memref<8x128xf32, #tpu.memory_space<vmem>>, vector<8x128xf32>
      %c0_15 = arith.constant 0 : index
      %c0_16 = arith.constant 0 : index
      %18 = vector.load %arg5[%c0_15, %c0_16] : memref<1x128xf32, #tpu.memory_space<vmem>>, vector<1x128xf32>
      %19 = vector.broadcast %18 : vector<1x128xf32> to vector<8x128xf32>
      %20 = arith.addf %17, %19 : vector<8x128xf32>
      %c0_17 = arith.constant 0 : index
      %c0_18 = arith.constant 0 : index
      %21 = vector.load %arg6[%c0_17, %c0_18] : memref<8x128xf32, #tpu.memory_space<vmem>>, vector<8x128xf32>
      tpu.vector_store %arg6[%c0_17, %c0_18], %20 {strides = array<i32>} : memref<8x128xf32, #tpu.memory_space<vmem>>, vector<8x128xf32>,
    } else {
    }
    return
  }
  func.func @transform_0(%arg0: i32, %arg1: i32, %arg2: i32) -> (i32, i32) {
    %c0_i32 = arith.constant 0 : i32
    return %arg0, %arg2 : i32, i32
  }
  func.func @transform_1(%arg0: i32, %arg1: i32, %arg2: i32) -> (i32, i32) {
    %c0_i32 = arith.constant 0 : i32
    return %arg2, %arg1 : i32, i32
  }
  func.func @transform_2(%arg0: i32, %arg1: i32, %arg2: i32) -> (i32, i32) {
    %c0_i32 = arith.constant 0 : i32
    %c0_i32_0 = arith.constant 0 : i32
    return %c0_i32, %arg1 : i32, i32
  }
  func.func @transform_3(%arg0: i32, %arg1: i32, %arg2: i32) -> (i32, i32) {
    %c0_i32 = arith.constant 0 : i32
    return %arg0, %arg1 : i32, i32
  }
}

</mosaic_0001>

<llo_original>
// kernel: binary_linear.1
$region0: #{binary_linear.1}
  #allocation0 [shape = 'u32[]', space=smem, size = 0x4, offset = 0x4, fixed_abs, tag = 'smem constant byte address 0x4 - core index']
  #allocation1 [shape = 'u32[144,128]{1,0:T(1,128)}', space=vmem, size = 0x12000, scoped, tag = 'internal scratch']
  #allocation2 [shape = 'f32[8,128]{1,0:T(8,128)}', space=vmem, size = 0x1000, scoped, tag = 'scratch operand']
  %s0 = inlined_call_operand.vmem [shape: f32[8,128], index: 0, kind: input, shape index: {}]
  %s1 = inlined_call_operand.vmem [shape: f32[128,128], index: 1, kind: input, shape index: {}]
  %s2 = inlined_call_operand.vmem [shape: f32[1,128], index: 2, kind: input, shape index: {}]
  %s3 = inlined_call_operand.hbm [shape: f32[8,128], index: 3, kind: output, shape index: {}]
  %s4 = sld [smem:[#allocation0]]
  $region30: #{binary_linear.1} parent=0
    _
  %s6 = ssub.s32 1, %s4
  %s7 = scalar_select 0, %s6, %s4
  $region1: #{binary_linear.1} parent=0
    #allocation3 [shape = 'u8[4096]{0}', space=vmem, size = 0x1000, scoped, tag = 'output window, operand 0, single buffered']
    #allocation4 [shape = 's32[1]{0}', space=sflag, size = 0x4, scoped, tag = 'scoped memory for binary_linear.1']
    %8 = vsyncpa [#allocation4], 0
    // Predicated region
    $region2: #{binary_linear.1} parent=1 // pred_check
      _
    $region3: #{binary_linear.1} parent=1 // pred_check_branch
      %10 = sbr.rel (0) target = $region5
    $region4: #{binary_linear.1} parent=1 // pred_region
      _
    $region5: #{binary_linear.1} parent=1 // pred_fallthru
      _
    // Predicated region
    $region6: #{binary_linear.1} parent=1 // pred_check
      _
    $region7: #{binary_linear.1} parent=1 // pred_check_branch
      %12 = sbr.rel (0) target = $region9
    $region8: #{binary_linear.1} parent=1 // pred_region
      _
    $region9: #{binary_linear.1} parent=1 // pred_fallthru
      _
    // Predicated region
    $region10: #{binary_linear.1} parent=1 // pred_check
      _
    $region11: #{binary_linear.1} parent=1 // pred_check_branch
      %14 = sbr.rel (0) target = $region13
    $region12: #{binary_linear.1} parent=1 // pred_region
      _
    $region13: #{binary_linear.1} parent=1 // pred_fallthru
      _
    %p15 = scmp.eq.s32.totalorder 0, 0
    // Predicated region
    $region14: #{binary_linear.1} parent=1 // pred_check
      %p16 = pneg %p15
    $region15: #{binary_linear.1} parent=1 // pred_check_branch
      %18 = sbr.rel (%p16) target = $region17
    $region16: #{binary_linear.1} parent=1 // pred_region
      %19 = vst [vmem:[#allocation2] sm:$0xff] 0.0
    $region17: #{binary_linear.1} parent=1 // pred_fallthru
      _
    %v20 = vld [vmem:[%s1] sm:$0xff]
    %v21 = vld [vmem:[%s1 + $0x8] sm:$0xff]
    %v22 = vld [vmem:[%s1 + $0x10] sm:$0xff]
    %v23 = vld [vmem:[%s1 + $0x18] sm:$0xff]
    %v24 = vld [vmem:[%s1 + $0x20] sm:$0xff]
    %v25 = vld [vmem:[%s1 + $0x28] sm:$0xff]
    %v26 = vld [vmem:[%s1 + $0x30] sm:$0xff]
    %v27 = vld [vmem:[%s1 + $0x38] sm:$0xff]
    %v28 = vld [vmem:[%s1 + $0x40] sm:$0xff]
    %v29 = vld [vmem:[%s1 + $0x48] sm:$0xff]
    %v30 = vld [vmem:[%s1 + $0x50] sm:$0xff]
    %v31 = vld [vmem:[%s1 + $0x58] sm:$0xff]
    %v32 = vld [vmem:[%s1 + $0x60] sm:$0xff]
    %v33 = vld [vmem:[%s1 + $0x68] sm:$0xff]
    %v34 = vld [vmem:[%s1 + $0x70] sm:$0xff]
    %v35 = vld [vmem:[%s1 + $0x78] sm:$0xff]
    %vm36 = vcmp.ge.f32.partialorder %v20, 0.0
    %vm37 = vcmp.ge.f32.partialorder %v21, 0.0
    %vm38 = vcmp.ge.f32.partialorder %v22, 0.0
    %vm39 = vcmp.ge.f32.partialorder %v23, 0.0
    %vm40 = vcmp.ge.f32.partialorder %v24, 0.0
    %vm41 = vcmp.ge.f32.partialorder %v25, 0.0
    %vm42 = vcmp.ge.f32.partialorder %v26, 0.0
    %vm43 = vcmp.ge.f32.partialorder %v27, 0.0
    %vm44 = vcmp.ge.f32.partialorder %v28, 0.0
    %vm45 = vcmp.ge.f32.partialorder %v29, 0.0
    %vm46 = vcmp.ge.f32.partialorder %v30, 0.0
    %vm47 = vcmp.ge.f32.partialorder %v31, 0.0
    %vm48 = vcmp.ge.f32.partialorder %v32, 0.0
    %vm49 = vcmp.ge.f32.partialorder %v33, 0.0
    %vm50 = vcmp.ge.f32.partialorder %v34, 0.0
    %vm51 = vcmp.ge.f32.partialorder %v35, 0.0
    %v52 = vsel %vm36, 1.0, -1.0
    %v53 = vsel %vm37, 1.0, -1.0
    %v54 = vsel %vm38, 1.0, -1.0
    %v55 = vsel %vm39, 1.0, -1.0
    %v56 = vsel %vm40, 1.0, -1.0
    %v57 = vsel %vm41, 1.0, -1.0
    %v58 = vsel %vm42, 1.0, -1.0
    %v59 = vsel %vm43, 1.0, -1.0
    %v60 = vsel %vm44, 1.0, -1.0
    %v61 = vsel %vm45, 1.0, -1.0
    %v62 = vsel %vm46, 1.0, -1.0
    %v63 = vsel %vm47, 1.0, -1.0
    %v64 = vsel %vm48, 1.0, -1.0
    %v65 = vsel %vm49, 1.0, -1.0
    %v66 = vsel %vm50, 1.0, -1.0
    %v67 = vsel %vm51, 1.0, -1.0
    %v68 = vld [vmem:[#allocation2] sm:$0xff]
    %v69 = vld [vmem:[%s0] sm:$0xff]
    %70 = vmatprep.subr.mxu0 0.0
    %71 = vmatpush1.msra.mxu0 %v52
    %72 = vmatprep.subr.mxu0 0.0
    %73 = vmatpush1.msra.mxu0 %v53
    %74 = vmatprep.subr.mxu0 0.0
    %75 = vmatpush1.msra.mxu0 %v54
    %76 = vmatprep.subr.mxu0 0.0
    %77 = vmatpush1.msra.mxu0 %v55
    %78 = vmatprep.subr.mxu0 0.0
    %79 = vmatpush1.msra.mxu0 %v56
    %80 = vmatprep.subr.mxu0 0.0
    %81 = vmatpush1.msra.mxu0 %v57
    %82 = vmatprep.subr.mxu0 0.0
    %83 = vmatpush1.msra.mxu0 %v58
    %84 = vmatprep.subr.mxu0 0.0
    %85 = vmatpush1.msra.mxu0 %v59
    %86 = vmatprep.subr.mxu0 0.0
    %87 = vmatpush1.msra.mxu0 %v60
    %88 = vmatprep.subr.mxu0 0.0
    %89 = vmatpush1.msra.mxu0 %v61
    %90 = vmatprep.subr.mxu0 0.0
    %91 = vmatpush1.msra.mxu0 %v62
    %92 = vmatprep.subr.mxu0 0.0
    %93 = vmatpush1.msra.mxu0 %v63
    %94 = vmatprep.subr.mxu0 0.0
    %95 = vmatpush1.msra.mxu0 %v64
    %96 = vmatprep.subr.mxu0 0.0
    %97 = vmatpush1.msra.mxu0 %v65
    %98 = vmatprep.subr.mxu0 0.0
    %99 = vmatpush1.msra.mxu0 %v66
    %100 = vmatprep.subr.mxu0 0.0
    %101 = vmatpush1.msra.mxu0 %v67
    %102 = vmatprep.subr.mxu0 0.0
    %103 = vmatpush1.msra.mxu0 0.0
    %104 = vmatprep.subr.mxu0 0.0
    %105 = vmatpush1.msra.mxu0 0.0
    %106 = vmatprep.subr.mxu0 0.0
    %107 = vmatpush1.msra.mxu0 0.0
    %108 = vmatprep.subr.mxu0 0.0
    %109 = vmatpush1.msra.mxu0 0.0
    %110 = vmatprep.subr.mxu0 0.0
    %111 = vmatpush1.msra.mxu0 0.0
    %112 = vmatprep.subr.mxu0 0.0
    %113 = vmatpush1.msra.mxu0 0.0
    %114 = vmatprep.subr.mxu0 0.0
    %115 = vmatpush1.msra.mxu0 0.0
    %116 = vmatprep.subr.mxu0 0.0
    %117 = vmatpush1.msra.mxu0 0.0
    %118 = vmatprep.subr.mxu0 0.0
    %119 = vmatpush1.msra.mxu0 0.0
    %120 = vmatprep.subr.mxu0 0.0
    %121 = vmatpush1.msra.mxu0 0.0
    %122 = vmatprep.subr.mxu0 0.0
    %123 = vmatpush1.msra.mxu0 0.0
    %124 = vmatprep.subr.mxu0 0.0
    %125 = vmatpush1.msra.mxu0 0.0
    %126 = vmatprep.subr.mxu0 0.0
    %127 = vmatpush1.msra.mxu0 0.0
    %128 = vmatprep.subr.mxu0 0.0
    %129 = vmatpush1.msra.mxu0 0.0
    %130 = vmatprep.subr.mxu0 0.0
    %131 = vmatpush1.msra.mxu0 0.0
    %132 = vmatprep.subr.mxu0 0.0
    %133 = vmatpush1.msra.mxu0 0.0
    %134 = vmatprep.mubr.f32.mxu0 0.0
    %135 = vmatmul.mubr.f32.gmra.mrb[0].mxu0 %v69
    %v136 = vpop.f32.mrb[0].mxu0
    %v137 = vadd.f32 0.0, %v136
    %v138 = vpop.f32.mrb[0].mxu0
    %139 = vdwg.mxu0
    %v140 = vadd.f32 %v68, %v137
    %141 = vst [vmem:[#allocation2] sm:$0xff] %v140
    // Predicated region
    $region18: #{binary_linear.1} parent=1 // pred_check
      %p142 = pneg %p15
    $region19: #{binary_linear.1} parent=1 // pred_check_branch
      %144 = sbr.rel (%p142) target = $region21
    $region20: #{binary_linear.1} parent=1 // pred_region
      %v145 = vld [vmem:[#allocation2] sm:$0xff]
      %v146 = vld [vmem:[%s2] sm:$0x1]
      %v148 = vlaneseq
      %v149 = vshrl.u32 %v148, 7
      %v150 = vsub.s32 0, %v149
      %v151 = vrot.slane %v146, %v150
      %v153 = vadd.f32 %v145, %v151
      %154 = vst [vmem:[#allocation3] sm:$0xff] %v153
    $region21: #{binary_linear.1} parent=1 // pred_fallthru
      _
    // Predicated region
    $region22: #{binary_linear.1} parent=1 // pred_check
      _
    $region23: #{binary_linear.1} parent=1 // pred_check_branch
      %156 = sbr.rel (0) target = $region25
    $region24: #{binary_linear.1} parent=1 // pred_region
      %s158 = ssub.s32 128, 128
      %159 = vsyncadd [#allocation4], %s158
      %s161 = sshll.u32 [#allocation3], 4
      %s162 = int_to_ptr.vmem [resolvable:$true] %s161
      %164 = dma.vmem_to_hbm [thread:$0]  %s162, 128, %s3, [#allocation4]
    $region25: #{binary_linear.1} parent=1 // pred_fallthru
      _
    // Predicated region
    $region26: #{binary_linear.1} parent=1 // pred_check
      _
    $region27: #{binary_linear.1} parent=1 // pred_check_branch
      %166 = sbr.rel (0) target = $region29
    $region28: #{binary_linear.1} parent=1 // pred_region
      %167 = dma.done [#allocation4], 128
    $region29: #{binary_linear.1} parent=1 // pred_fallthru
      _
    %168 = vsyncpa [#allocation4], 1

</llo_original>
